<compile_context>
chip_gen: v6e
topology: v6e:2x2x1
jax: 0.10.0
libtpu: 0.0.40
codegen_flags: <defaults>
</compile_context>

<pallas_src>
import functools

import jax
import jax.numpy as jnp
from jax.experimental import pallas as pl
from jax.experimental.pallas import tpu as pltpu

NUM_TARGETS = 14          # num_targets in the module
NUM_CLASSES = 18          # xrv ResNet outputs 18 pathology logits
POOL_K = 2                # downsample_kernel_size

_MAX_LANE_TILE = 16384            # <= 128 unrolled 128-lane slices per step
_TARGET_BLOCK_BYTES = 2 << 20     # ~2 MiB per input per buffer


def _round_up(x, m):
    return ((x + m - 1) // m) * m


def _choose_row_tile(m):
    """Row tile: multiple of 8 dividing m, preferring >=2 tiles for megacore."""
    for r in (64, 32, 16, 8):
        if m % r == 0 and (m // r >= 2 or r == 8):
            return r
    return m   # full-extent escape hatch (m < 8 or not a multiple of 8)


def _choose_lane_tile(n, r):
    """Largest power-of-two multiple of 128 under the VMEM / unroll caps."""
    max_l = min(_MAX_LANE_TILE,
                max(128, (_TARGET_BLOCK_BYTES // (r * 4)) // 128 * 128))
    cands = []
    l = 128
    while l <= max_l:
        cands.append(l)
        l *= 2
    for cand in reversed(cands):          # prefer an exact divisor (no padding)
        if n % cand == 0:
            return cand
    for cand in reversed(cands):          # else accept <= 1/8 padding overhead
        if ((-n) % cand) * 8 <= n:
            return cand
    return 128


def _diff_sum_kernel(clean_ref, den_ref, out_ref, *, num_slices):
    """Grid = (row tiles, spatial tiles).  Spatial axis is the reduction.

    out_ref is a (R, 128) f32 block resident across the spatial axis; it holds
    the lane-wide partial sums of (denoised - clean).  Only VPU adds here — the
    cross-lane reduce and the tiny head matmul happen outside the kernel.
    """
    j = pl.program_id(1)

    @pl.when(j == 0)
    def _():
        out_ref[...] = jnp.zeros_like(out_ref)

    acc = out_ref[...]
    for k in range(num_slices):           # static, aligned 128-lane slices
        lo = k * 128
        d = den_ref[:, lo:lo + 128]
        c = clean_ref[:, lo:lo + 128]
        acc = acc + (d - c).astype(jnp.float32)
    out_ref[...] = acc


@jax.jit
def diagnosis_consistency_loss(clean_img, denoised_img, head_w, head_b):
    """clean_img, denoised_img: NCHW [B, C, H, W] in [0, 1] (f32 or bf16).

    head_w: (C, 18) surrogate diagnosis-head weights; head_b: (1, 18) bias
    (the bias cancels in the logit difference, so it never enters the math).
    """
    del head_b  # cancels exactly in (logits_denoised - logits_clean)
    B, C, H, W = clean_img.shape
    assert H % POOL_K == 0 and W % POOL_K == 0, "pool+GAP fusion needs even H, W"
    M = B * C
    N = H * W

    R = _choose_row_tile(M)
    L = _choose_lane_tile(max(N, 128), R)
    N_pad = _round_up(N, L)

    # Free reshape to a dense 2-D slab; keep the input dtype (no cast pass).
    clean_flat = clean_img.reshape(M, N)
    den_flat = denoised_img.reshape(M, N)
    if N_pad != N:
        # Zero padding is exact for the sums (the scale below uses the true N).
        pad = ((0, 0), (0, N_pad - N))
        clean_flat = jnp.pad(clean_flat, pad)
        den_flat = jnp.pad(den_flat, pad)

    grid = (M // R, N_pad // L)
    kernel = functools.partial(_diff_sum_kernel, num_slices=L // 128)
    img_spec = pl.BlockSpec((R, L), lambda i, j: (i, j))
    itemsize = jnp.dtype(clean_flat.dtype).itemsize

    partial_sums = pl.pallas_call(
        kernel,
        out_shape=jax.ShapeDtypeStruct((M, 128), jnp.float32),
        grid_spec=pltpu.PrefetchScalarGridSpec(
            num_scalar_prefetch=0,
            grid=grid,
            in_specs=[img_spec, img_spec],
            out_specs=pl.BlockSpec((R, 128), lambda i, j: (i, 0))),
        compiler_params=pltpu.CompilerParams(
            dimension_semantics=("parallel", "arbitrary"),
            vmem_limit_bytes=32 * 1024 * 1024),
        cost_estimate=pl.CostEstimate(
            flops=2 * M * N_pad,
            transcendentals=0,
            bytes_accessed=2 * M * N_pad * itemsize + M * 128 * 4),
    )(clean_flat, den_flat)

    # Epilogue in plain JAX (tiny): cross-lane reduce, head matmul, MSE mean.
    diff_sum = jnp.sum(partial_sums, axis=-1)                 # (B*C,)
    diff_feat = diff_sum.reshape(B, C) * (2048.0 / float(N))  # feat_d - feat_c
    w14 = head_w[:, :NUM_TARGETS].astype(jnp.float32)         # (C, 14)
    diff_logits = diff_feat @ w14                             # (B, 14)
    return jnp.mean(diff_logits * diff_logits)


def _reference_loss(clean_img, denoised_img, head_w, head_b):
    """Pure-JAX reference (explicit pool / norm / GAP / head, no fusion)."""
    def diagnose(x):
        b, c, h, w = x.shape
        pooled = x.reshape(b, c, h // POOL_K, POOL_K,
                           w // POOL_K, POOL_K).mean(axis=(3, 5))
        xrv = pooled * 2048.0 - 1024.0
        feat = xrv.mean(axis=(2, 3))
        return feat @ head_w + head_b
    lc = jax.lax.stop_gradient(diagnose(clean_img))   # torch.no_grad branch
    ld = diagnose(denoised_img)
    d = (ld - lc)[:, :NUM_TARGETS]
    return jnp.mean(d * d)


if __name__ == "__main__":
    key = jax.random.PRNGKey(0)
    k1, k2, k3, k4 = jax.random.split(key, 4)
    B, C, H, W = 2, 4, 16, 16

    clean = jax.random.uniform(k1, (B, C, H, W), jnp.float32)
    denoised = jnp.clip(
        clean + 0.05 * jax.random.normal(k2, (B, C, H, W), jnp.float32),
        0.0, 1.0)

    # Deterministic surrogate diagnosis-head parameters (stand-in for ResNet50).
    head_w = 0.02 * jax.random.normal(k3, (C, NUM_CLASSES), jnp.float32)
    head_b = 0.01 * jax.random.normal(k4, (1, NUM_CLASSES), jnp.float32)

    loss = jax.block_until_ready(
        diagnosis_consistency_loss(clean, denoised, head_w, head_b))
    ref = _reference_loss(clean, denoised, head_w, head_b)
    assert jnp.isfinite(loss), loss
    assert jnp.allclose(loss, ref, rtol=1e-3, atol=1e-7), (loss, ref)
    print("KERNEL_OK")
</pallas_src>

<mosaic_0001>
module attributes {stable_mosaic.version = 11 : i64} {
  func.func @_diff_sum_kernel(%arg0: i32, %arg1: i32, %arg2: memref<8x256xf32, #tpu.memory_space<vmem>>, %arg3: memref<8x256xf32, #tpu.memory_space<vmem>>, %arg4: memref<8x128xf32, #tpu.memory_space<vmem>>) attributes {dimension_semantics = [#tpu.dimension_semantics<parallel>, #tpu.dimension_semantics<arbitrary>], iteration_bounds = array<i64: 1, 1>, scalar_prefetch = 0 : i64, scratch_operands = 0 : i64, tpu.core_type = #tpu.core_type<tc>, window_params = [{transform_indices = @transform_0, window_bounds = array<i64: 8, 256>}, {transform_indices = @transform_1, window_bounds = array<i64: 8, 256>}, {transform_indices = @transform_2, window_bounds = array<i64: 8, 128>}]} {
    %c0_i32 = arith.constant 0 : i32
    %0 = arith.cmpi eq, %arg1, %c0_i32 : i32
    %1 = arith.extui %0 : i1 to i32
    %c0_i32_0 = arith.constant 0 : i32
    %2 = arith.cmpi ne, %1, %c0_i32_0 : i32
    scf.if %2 {
      %cst = arith.constant 0.000000e+00 : f32
      %13 = vector.broadcast %cst : f32 to vector<8x128xf32>
      %c0_11 = arith.constant 0 : index
      %c0_12 = arith.constant 0 : index
      %14 = vector.load %arg4[%c0_11, %c0_12] : memref<8x128xf32, #tpu.memory_space<vmem>>, vector<8x128xf32>
      tpu.vector_store %arg4[%c0_11, %c0_12], %13 {strides = array<i32>} : memref<8x128xf32, #tpu.memory_space<vmem>>, vector<8x128xf32>,
    } else {
    }
    %c0 = arith.constant 0 : index
    %c0_1 = arith.constant 0 : index
    %3 = vector.load %arg4[%c0, %c0_1] : memref<8x128xf32, #tpu.memory_space<vmem>>, vector<8x128xf32>
    %c0_2 = arith.constant 0 : index
    %c0_3 = arith.constant 0 : index
    %4 = vector.load %arg3[%c0_2, %c0_3] : memref<8x256xf32, #tpu.memory_space<vmem>>, vector<8x128xf32>
    %c0_4 = arith.constant 0 : index
    %c0_5 = arith.constant 0 : index
    %5 = vector.load %arg2[%c0_4, %c0_5] : memref<8x256xf32, #tpu.memory_space<vmem>>, vector<8x128xf32>
    %6 = arith.subf %4, %5 : vector<8x128xf32>
    %7 = arith.addf %3, %6 : vector<8x128xf32>
    %c0_6 = arith.constant 0 : index
    %c128 = arith.constant 128 : index
    %8 = vector.load %arg3[%c0_6, %c128] : memref<8x256xf32, #tpu.memory_space<vmem>>, vector<8x128xf32>
    %c0_7 = arith.constant 0 : index
    %c128_8 = arith.constant 128 : index
    %9 = vector.load %arg2[%c0_7, %c128_8] : memref<8x256xf32, #tpu.memory_space<vmem>>, vector<8x128xf32>
    %10 = arith.subf %8, %9 : vector<8x128xf32>
    %11 = arith.addf %7, %10 : vector<8x128xf32>
    %c0_9 = arith.constant 0 : index
    %c0_10 = arith.constant 0 : index
    %12 = vector.load %arg4[%c0_9, %c0_10] : memref<8x128xf32, #tpu.memory_space<vmem>>, vector<8x128xf32>
    tpu.vector_store %arg4[%c0_9, %c0_10], %11 {strides = array<i32>} : memref<8x128xf32, #tpu.memory_space<vmem>>, vector<8x128xf32>,
    return
  }
  func.func @transform_0(%arg0: i32, %arg1: i32) -> (i32, i32) {
    %c0_i32 = arith.constant 0 : i32
    return %arg0, %arg1 : i32, i32
  }
  func.func @transform_1(%arg0: i32, %arg1: i32) -> (i32, i32) {
    %c0_i32 = arith.constant 0 : i32
    return %arg0, %arg1 : i32, i32
  }
  func.func @transform_2(%arg0: i32, %arg1: i32) -> (i32, i32) {
    %c0_i32 = arith.constant 0 : i32
    %c0_i32_0 = arith.constant 0 : i32
    return %arg0, %c0_i32 : i32, i32
  }
}

</mosaic_0001>

<llo_original>
// kernel: diagnosis_consistency_loss.1
$region0: #{diagnosis_consistency_loss.1}
  #allocation0 [shape = 'u32[]', space=smem, size = 0x4, offset = 0x4, fixed_abs, tag = 'smem constant byte address 0x4 - core index']
  #allocation1 [shape = 'u32[144,128]{1,0:T(1,128)}', space=vmem, size = 0x12000, scoped, tag = 'internal scratch']
  %s0 = inlined_call_operand.vmem [shape: f32[8,256], index: 0, kind: input, shape index: {}]
  %s1 = inlined_call_operand.vmem [shape: f32[8,256], index: 1, kind: input, shape index: {}]
  %s2 = inlined_call_operand.vmem [shape: f32[8,128], index: 2, kind: output, shape index: {}]
  %s3 = sld [smem:[#allocation0]]
  $region22: #{diagnosis_consistency_loss.1} parent=0
    _
  %s5 = ssub.s32 1, %s3
  %s6 = scalar_select 0, %s5, %s3
  // Predicated region
  $region2: #{diagnosis_consistency_loss.1} parent=0 // pred_check
    _
  $region3: #{diagnosis_consistency_loss.1} parent=0 // pred_check_branch
    %8 = sbr.rel (0) target = $region5
  $region4: #{diagnosis_consistency_loss.1} parent=0 // pred_region
    _
  $region5: #{diagnosis_consistency_loss.1} parent=0 // pred_fallthru
    _
  // Predicated region
  $region6: #{diagnosis_consistency_loss.1} parent=0 // pred_check
    _
  $region7: #{diagnosis_consistency_loss.1} parent=0 // pred_check_branch
    %10 = sbr.rel (0) target = $region9
  $region8: #{diagnosis_consistency_loss.1} parent=0 // pred_region
    _
  $region9: #{diagnosis_consistency_loss.1} parent=0 // pred_fallthru
    _
  %p11 = scmp.eq.s32.totalorder 0, 0
  // Predicated region
  $region10: #{diagnosis_consistency_loss.1} parent=0 // pred_check
    %p12 = pneg %p11
  $region11: #{diagnosis_consistency_loss.1} parent=0 // pred_check_branch
    %14 = sbr.rel (%p12) target = $region13
  $region12: #{diagnosis_consistency_loss.1} parent=0 // pred_region
    %15 = vst [vmem:[%s2] sm:$0xff] 0.0
  $region13: #{diagnosis_consistency_loss.1} parent=0 // pred_fallthru
    _
  %v16 = vld [vmem:[%s2] sm:$0xff]
  %v17 = vld [vmem:[%s1] sm:$0xff]
  %v18 = vld [vmem:[%s0] sm:$0xff]
  %v19 = vsub.f32 %v17, %v18
  %v20 = vadd.f32 %v16, %v19
  %v21 = vld [vmem:[%s1 + $0x8] sm:$0xff]
  %v22 = vld [vmem:[%s0 + $0x8] sm:$0xff]
  %v23 = vsub.f32 %v21, %v22
  %v24 = vadd.f32 %v20, %v23
  %25 = vst [vmem:[%s2] sm:$0xff] %v24
  // Predicated region
  $region14: #{diagnosis_consistency_loss.1} parent=0 // pred_check
    _
  $region15: #{diagnosis_consistency_loss.1} parent=0 // pred_check_branch
    %27 = sbr.rel (0) target = $region17
  $region16: #{diagnosis_consistency_loss.1} parent=0 // pred_region
    _
  $region17: #{diagnosis_consistency_loss.1} parent=0 // pred_fallthru
    _
  // Predicated region
  $region18: #{diagnosis_consistency_loss.1} parent=0 // pred_check
    _
  $region19: #{diagnosis_consistency_loss.1} parent=0 // pred_check_branch
    %29 = sbr.rel (0) target = $region21
  $region20: #{diagnosis_consistency_loss.1} parent=0 // pred_region
    _
  $region21: #{diagnosis_consistency_loss.1} parent=0 // pred_fallthru
    _

</llo_original>
